<compile_context>
chip_gen: v7x
topology: tpu7x:2x2x1
jax: 0.10.0
libtpu: 0.0.40
codegen_flags: <defaults>
</compile_context>

<pallas_src>
import functools

import numpy as np
import jax
import jax.numpy as jnp
from jax.experimental import pallas as pl
from jax.experimental.pallas import tpu as pltpu


def _contrastive_kernel(o1_ref, o2_ref, t_ref, loss_ref, *,
                        margin, eps, n_valid, tile_n):
    """Per-tile contrastive loss.

    o1_ref / o2_ref : (D_pad, TILE_N)  embeddings (features on sublanes,
                                       samples on lanes)
    t_ref           : (1, TILE_N)      float targets (1 = same class)
    loss_ref        : (1, TILE_N)      per-sample losses (padded cols -> 0)
    """
    i = pl.program_id(0)

    diff = o2_ref[...] - o1_ref[...]                       # (D_pad, TILE_N)
    # squared L2 distance per sample: reduce over the feature (sublane) axis,
    # result stays lane-dense.
    dist = jnp.sum(diff * diff, axis=0, keepdims=True)     # (1, TILE_N)

    t = t_ref[...]                                         # (1, TILE_N)
    hinge = jnp.maximum(margin - jnp.sqrt(dist + eps), 0.0)
    losses = 0.5 * (t * dist + (1.0 - t) * hinge * hinge)  # (1, TILE_N)

    # Zero out padded samples (their hinge term is nonzero otherwise).
    col = i * tile_n + jax.lax.broadcasted_iota(jnp.int32, (1, tile_n), 1)
    loss_ref[...] = jnp.where(col < n_valid, losses, 0.0)


def contrastive_loss_pallas(output1, output2, target, margin,
                            size_average=True, eps=1e-9):
    """ContrastiveLoss.forward equivalent.

    output1, output2 : (N, D) float embeddings
    target           : (N,)   labels, 1 if same class else 0
    Returns a scalar (mean over samples if size_average else sum).
    """
    assert output1.shape == output2.shape and output1.ndim == 2
    N, D = output1.shape
    assert target.shape == (N,)

    margin = float(margin)
    eps = float(eps)

    # ---- pad/transpose to a lane-dense (D_pad, N_pad) layout -------------
    LANE, SUB = 128, 8
    D_pad = ((D + SUB - 1) // SUB) * SUB
    N_pad = ((N + LANE - 1) // LANE) * LANE

    # tile the batch axis; cap the per-block footprint (2 inputs, f32,
    # double-buffered) well under the scoped VMEM limit on every generation.
    max_tile_elems = 4 * 1024 * 1024 // 4                  # 4 MiB of f32 per input block
    tile_n = max(LANE, min(2048, (max_tile_elems // max(D_pad, 1)) // LANE * LANE))
    tile_n = min(tile_n, N_pad)
    N_pad = ((N_pad + tile_n - 1) // tile_n) * tile_n       # make grid exact

    o1 = jnp.asarray(output1, jnp.float32)
    o2 = jnp.asarray(output2, jnp.float32)
    tgt = jnp.asarray(target, jnp.float32)

    o1T = jnp.pad(o1.T, ((0, D_pad - D), (0, N_pad - N)))   # (D_pad, N_pad)
    o2T = jnp.pad(o2.T, ((0, D_pad - D), (0, N_pad - N)))   # (D_pad, N_pad)
    tgt2 = jnp.pad(tgt.reshape(1, N), ((0, 0), (0, N_pad - N)))  # (1, N_pad)

    grid = (N_pad // tile_n,)

    kernel = functools.partial(_contrastive_kernel,
                               margin=margin, eps=eps,
                               n_valid=N, tile_n=tile_n)

    per_sample = pl.pallas_call(
        kernel,
        out_shape=jax.ShapeDtypeStruct((1, N_pad), jnp.float32),
        grid_spec=pltpu.PrefetchScalarGridSpec(
            num_scalar_prefetch=0,
            grid=grid,
            in_specs=[
                pl.BlockSpec((D_pad, tile_n), lambda i: (0, i)),
                pl.BlockSpec((D_pad, tile_n), lambda i: (0, i)),
                pl.BlockSpec((1, tile_n), lambda i: (0, i)),
            ],
            out_specs=pl.BlockSpec((1, tile_n), lambda i: (0, i)),
        ),
        compiler_params=pltpu.CompilerParams(
            dimension_semantics=("parallel",),
            vmem_limit_bytes=32 * 1024 * 1024,
        ),
    )(o1T, o2T, tgt2)

    total = jnp.sum(per_sample)          # padded columns are exact zeros
    return total / N if size_average else total


# ---------------------- pure-JAX reference (for verification) ----------------
def _ref_contrastive(output1, output2, target, margin,
                     size_average=True, eps=1e-9):
    o1 = jnp.asarray(output1, jnp.float32)
    o2 = jnp.asarray(output2, jnp.float32)
    t = jnp.asarray(target, jnp.float32)
    distances = jnp.sum((o2 - o1) ** 2, axis=1)
    hinge = jnp.maximum(margin - jnp.sqrt(distances + eps), 0.0)
    losses = 0.5 * (t * distances + (1.0 - t) * hinge * hinge)
    return jnp.mean(losses) if size_average else jnp.sum(losses)


if __name__ == "__main__":
    key = jax.random.PRNGKey(0)
    k1, k2, k3 = jax.random.split(key, 3)

    N, D = 8, 32           # batch of embedding pairs, hidden=32
    margin = 1.0

    output1 = jax.random.normal(k1, (N, D), jnp.float32)
    output2 = output1 + 0.3 * jax.random.normal(k2, (N, D), jnp.float32)
    target = jax.random.bernoulli(k3, 0.5, (N,)).astype(jnp.int32)

    # mean-reduced loss (size_average=True, the default)
    loss_mean = contrastive_loss_pallas(output1, output2, target, margin,
                                        size_average=True)
    jax.block_until_ready(loss_mean)
    ref_mean = _ref_contrastive(output1, output2, target, margin,
                                size_average=True)
    jax.block_until_ready(ref_mean)

    # sum-reduced loss (size_average=False)
    loss_sum = contrastive_loss_pallas(output1, output2, target, margin,
                                       size_average=False)
    jax.block_until_ready(loss_sum)
    ref_sum = _ref_contrastive(output1, output2, target, margin,
                               size_average=False)
    jax.block_until_ready(ref_sum)

    if not np.allclose(np.asarray(loss_mean), np.asarray(ref_mean),
                       atol=1e-6, rtol=1e-5):
        raise AssertionError(f"mean mismatch: pallas={loss_mean} ref={ref_mean}")
    if not np.allclose(np.asarray(loss_sum), np.asarray(ref_sum),
                       atol=1e-6, rtol=1e-5):
        raise AssertionError(f"sum mismatch: pallas={loss_sum} ref={ref_sum}")

    print("KERNEL_OK")
</pallas_src>

<mosaic_0001>
module attributes {stable_mosaic.version = 11 : i64} {
  func.func @_contrastive_kernel(%arg0: i32, %arg1: memref<32x128xf32, #tpu.memory_space<vmem>>, %arg2: memref<32x128xf32, #tpu.memory_space<vmem>>, %arg3: memref<1x128xf32, #tpu.memory_space<vmem>>, %arg4: memref<1x128xf32, #tpu.memory_space<vmem>>) attributes {dimension_semantics = [#tpu.dimension_semantics<parallel>], iteration_bounds = array<i64: 1>, scalar_prefetch = 0 : i64, scratch_operands = 0 : i64, tpu.core_type = #tpu.core_type<tc>, window_params = [{transform_indices = @transform_0, window_bounds = array<i64: 32, 128>}, {transform_indices = @transform_1, window_bounds = array<i64: 32, 128>}, {transform_indices = @transform_2, window_bounds = array<i64: 1, 128>}, {transform_indices = @transform_3, window_bounds = array<i64: 1, 128>}]} {
    %c0 = arith.constant 0 : index
    %c0_0 = arith.constant 0 : index
    %0 = vector.load %arg2[%c0, %c0_0] : memref<32x128xf32, #tpu.memory_space<vmem>>, vector<32x128xf32>
    %c0_1 = arith.constant 0 : index
    %c0_2 = arith.constant 0 : index
    %1 = vector.load %arg1[%c0_1, %c0_2] : memref<32x128xf32, #tpu.memory_space<vmem>>, vector<32x128xf32>
    %2 = arith.subf %0, %1 : vector<32x128xf32>
    %3 = arith.mulf %2, %2 : vector<32x128xf32>
    %cst = arith.constant dense<0.000000e+00> : vector<128xf32>
    %4 = vector.multi_reduction <add>, %3, %cst [0] : vector<32x128xf32> to vector<128xf32>
    %5 = vector.shape_cast %4 : vector<128xf32> to vector<1x128xf32>
    %c0_3 = arith.constant 0 : index
    %c0_4 = arith.constant 0 : index
    %6 = vector.load %arg3[%c0_3, %c0_4] : memref<1x128xf32, #tpu.memory_space<vmem>>, vector<1x128xf32>
    %cst_5 = arith.constant 9.99999971E-10 : f32
    %7 = vector.broadcast %cst_5 : f32 to vector<1x128xf32>
    %8 = arith.addf %5, %7 : vector<1x128xf32>
    %9 = math.sqrt %8 : vector<1x128xf32>
    %cst_6 = arith.constant 1.000000e+00 : f32
    %10 = vector.broadcast %cst_6 : f32 to vector<1x128xf32>
    %11 = arith.subf %10, %9 : vector<1x128xf32>
    %cst_7 = arith.constant 0.000000e+00 : f32
    %12 = vector.broadcast %cst_7 : f32 to vector<1x128xf32>
    %13 = arith.maximumf %11, %12 : vector<1x128xf32>
    %14 = arith.mulf %6, %5 : vector<1x128xf32>
    %cst_8 = arith.constant 1.000000e+00 : f32
    %15 = vector.broadcast %cst_8 : f32 to vector<1x128xf32>
    %16 = arith.subf %15, %6 : vector<1x128xf32>
    %17 = arith.mulf %16, %13 : vector<1x128xf32>
    %18 = arith.mulf %17, %13 : vector<1x128xf32>
    %19 = arith.addf %14, %18 : vector<1x128xf32>
    %cst_9 = arith.constant 5.000000e-01 : f32
    %20 = vector.broadcast %cst_9 : f32 to vector<1x128xf32>
    %21 = arith.mulf %20, %19 : vector<1x128xf32>
    %c128_i32 = arith.constant 128 : i32
    %22 = arith.muli %arg0, %c128_i32 : i32
    %23 = tpu.iota {dimensions = array<i32: 1>} : vector<1x128xi32>
    %24 = vector.broadcast %22 : i32 to vector<1x128xi32>
    %25 = arith.addi %24, %23 : vector<1x128xi32>
    %c8_i32 = arith.constant 8 : i32
    %26 = vector.broadcast %c8_i32 : i32 to vector<1x128xi32>
    %27 = arith.cmpi slt, %25, %26 : vector<1x128xi32>
    %cst_10 = arith.constant 0.000000e+00 : f32
    %28 = vector.broadcast %cst_10 : f32 to vector<1x128xf32>
    %29 = arith.select %27, %21, %28 : vector<1x128xi1>, vector<1x128xf32>
    %c0_11 = arith.constant 0 : index
    %c0_12 = arith.constant 0 : index
    %30 = vector.load %arg4[%c0_11, %c0_12] : memref<1x128xf32, #tpu.memory_space<vmem>>, vector<1x128xf32>
    tpu.vector_store %arg4[%c0_11, %c0_12], %29 {strides = array<i32>} : memref<1x128xf32, #tpu.memory_space<vmem>>, vector<1x128xf32>,
    return
  }
  func.func @transform_0(%arg0: i32) -> (i32, i32) {
    %c0_i32 = arith.constant 0 : i32
    %c0_i32_0 = arith.constant 0 : i32
    return %c0_i32, %arg0 : i32, i32
  }
  func.func @transform_1(%arg0: i32) -> (i32, i32) {
    %c0_i32 = arith.constant 0 : i32
    %c0_i32_0 = arith.constant 0 : i32
    return %c0_i32, %arg0 : i32, i32
  }
  func.func @transform_2(%arg0: i32) -> (i32, i32) {
    %c0_i32 = arith.constant 0 : i32
    %c0_i32_0 = arith.constant 0 : i32
    return %c0_i32, %arg0 : i32, i32
  }
  func.func @transform_3(%arg0: i32) -> (i32, i32) {
    %c0_i32 = arith.constant 0 : i32
    %c0_i32_0 = arith.constant 0 : i32
    return %c0_i32, %arg0 : i32, i32
  }
}

</mosaic_0001>

<llo_original>
// kernel: tpu_custom_call.1
$region0: #{tpu_custom_call.1}
  #allocation0 [shape = 'u32[]', space=smem, size = 0x4, offset = 0x4, fixed_abs, tag = 'smem constant byte address 0x4 - core index']
  #allocation1 [shape = 'u32[144,128]{1,0:T(1,128)}', space=vmem, size = 0x12000, scoped, tag = 'internal scratch']
  %s0 = inlined_call_operand.hbm [shape: f32[32,128], index: 0, kind: input, shape index: {}]
  %s1 = inlined_call_operand.hbm [shape: f32[32,128], index: 1, kind: input, shape index: {}]
  %s2 = inlined_call_operand.vmem [shape: f32[1,128], index: 2, kind: input, shape index: {}]
  %s3 = inlined_call_operand.hbm [shape: f32[1,128], index: 3, kind: output, shape index: {}]
  %s4 = sld [smem:[#allocation0]]
  $region30: #{tpu_custom_call.1} parent=0
    _
  %s6 = ssub.s32 1, %s4
  %s7 = scalar_select 0, %s6, %s4
  $region1: #{tpu_custom_call.1} parent=0
    #allocation2 [shape = 'u8[16384]{0}', space=vmem, size = 0x4000, scoped, tag = 'input window, operand 0, single buffered']
    #allocation3 [shape = 's32[1]{0}', space=sflag, size = 0x4, scoped, tag = 'scoped memory for tpu_custom_call.1']
    #allocation4 [shape = 's32[1]{0}', space=sflag, size = 0x4, scoped, tag = 'scoped memory for tpu_custom_call.1']
    #allocation5 [shape = 'u8[16384]{0}', space=vmem, size = 0x4000, scoped, tag = 'input window, operand 1, single buffered']
    #allocation6 [shape = 's32[1]{0}', space=sflag, size = 0x4, scoped, tag = 'scoped memory for tpu_custom_call.1']
    #allocation7 [shape = 'u8[512]{0}', space=vmem, size = 0x400, scoped, tag = 'output window, operand 0, single buffered']
    %8 = vsyncpa [#allocation3], 0
    %9 = vsyncpa [#allocation6], 0
    %10 = vsyncpa [#allocation4], 0
    // Predicated region
    $region2: #{tpu_custom_call.1} parent=1 // pred_check
      _
    $region3: #{tpu_custom_call.1} parent=1 // pred_check_branch
      %12 = sbr.rel (0) target = $region5
    $region4: #{tpu_custom_call.1} parent=1 // pred_region
      %s14 = ssub.s32 512, 512
      %15 = vsyncadd [#allocation3], %s14
      %s16 = sshll.u32 [#allocation2], 4
      %s17 = int_to_ptr.vmem [resolvable:$true] %s16
      %22 = dma.hbm_to_vmem [thread:$0]  %s0, 512, %s17, [#allocation3], 128, 128, 8
    $region5: #{tpu_custom_call.1} parent=1 // pred_fallthru
      _
    // Predicated region
    $region6: #{tpu_custom_call.1} parent=1 // pred_check
      _
    $region7: #{tpu_custom_call.1} parent=1 // pred_check_branch
      %24 = sbr.rel (0) target = $region9
    $region8: #{tpu_custom_call.1} parent=1 // pred_region
      %s26 = ssub.s32 512, 512
      %27 = vsyncadd [#allocation6], %s26
      %s28 = sshll.u32 [#allocation5], 4
      %s29 = int_to_ptr.vmem [resolvable:$true] %s28
      %34 = dma.hbm_to_vmem [thread:$0]  %s1, 512, %s29, [#allocation6], 128, 128, 8
    $region9: #{tpu_custom_call.1} parent=1 // pred_fallthru
      _
    // Predicated region
    $region10: #{tpu_custom_call.1} parent=1 // pred_check
      _
    $region11: #{tpu_custom_call.1} parent=1 // pred_check_branch
      %36 = sbr.rel (0) target = $region13
    $region12: #{tpu_custom_call.1} parent=1 // pred_region
      _
    $region13: #{tpu_custom_call.1} parent=1 // pred_fallthru
      _
    // Predicated region
    $region14: #{tpu_custom_call.1} parent=1 // pred_check
      _
    $region15: #{tpu_custom_call.1} parent=1 // pred_check_branch
      %38 = sbr.rel (0) target = $region17
    $region16: #{tpu_custom_call.1} parent=1 // pred_region
      %39 = dma.done [#allocation3], 512
    $region17: #{tpu_custom_call.1} parent=1 // pred_fallthru
      _
    // Predicated region
    $region18: #{tpu_custom_call.1} parent=1 // pred_check
      _
    $region19: #{tpu_custom_call.1} parent=1 // pred_check_branch
      %41 = sbr.rel (0) target = $region21
    $region20: #{tpu_custom_call.1} parent=1 // pred_region
      %42 = dma.done [#allocation6], 512
    $region21: #{tpu_custom_call.1} parent=1 // pred_fallthru
      _
    %v43 = vld [vmem:[#allocation5] sm:$0xff]
    %v44 = vld [vmem:[#allocation5 + $0x8] sm:$0xff]
    %v45 = vld [vmem:[#allocation5 + $0x10] sm:$0xff]
    %v46 = vld [vmem:[#allocation5 + $0x18] sm:$0xff]
    %v47 = vld [vmem:[#allocation2] sm:$0xff]
    %v48 = vld [vmem:[#allocation2 + $0x8] sm:$0xff]
    %v49 = vld [vmem:[#allocation2 + $0x10] sm:$0xff]
    %v50 = vld [vmem:[#allocation2 + $0x18] sm:$0xff]
    %v51 = vsub.f32 %v43, %v47
    %v52 = vsub.f32 %v44, %v48
    %v53 = vsub.f32 %v45, %v49
    %v54 = vsub.f32 %v46, %v50
    %v55 = vmul.f32 %v51, %v51
    %v56 = vmul.f32 %v52, %v52
    %v57 = vmul.f32 %v53, %v53
    %v58 = vmul.f32 %v54, %v54
    %v59 = vadd.f32 %v55, %v56
    %v60 = vadd.f32 %v59, %v57
    %v61 = vadd.f32 %v60, %v58
    %v62 = vrot.slane %v61, 4
    %v63 = vadd.f32 %v61, %v62
    %v64 = vrot.slane %v63, 2
    %v65 = vadd.f32 %v63, %v64
    %v66 = vrot.slane %v65, 1
    %v67 = vadd.f32 %v65, %v66
    %v68 = vld [vmem:[%s2] sm:$0x1]
    %v69 = vadd.f32 %v67, 1e-09
    %v70 = vrsqrt.pop %v69
    %v71 = vmul.f32 %v69, %v70
    %vm72 = vcmp.eq.f32.partialorder %v69, inf
    %v73 = vsel %vm72, %v69, %v71
    %vm74 = vcmp.eq.f32.partialorder %v69, 0.0
    %v75 = vand.u32 %v69, 2147483648
    %v76 = vsel %vm74, %v75, %v73
    %v77 = vsub.f32 1.0, %v76
    %v78 = vmax.f32 %v77, 0.0
    %v79 = vmul.f32 %v68, %v67
    %v80 = vsub.f32 1.0, %v68
    %v81 = vmul.f32 %v80, %v78
    %v82 = vmul.f32 %v81, %v78
    %v83 = vadd.f32 %v79, %v82
    %v84 = vmul.f32 %v83, 0.5
    %s85 = smul.u32 0, 128
    %v86 = vlaneseq
    %v87 = vand.u32 %v86, 127
    %v88 = vstv %s85
    %v89 = vadd.s32 %v88, %v87
    %vm90 = vcmp.lt.s32.totalorder %v89, 8
    %v91 = vsel %vm90, %v84, 0.0
    %92 = vst [vmem:[#allocation7] sm:$0x1] %v91
    // Predicated region
    $region22: #{tpu_custom_call.1} parent=1 // pred_check
      _
    $region23: #{tpu_custom_call.1} parent=1 // pred_check_branch
      %94 = sbr.rel (0) target = $region25
    $region24: #{tpu_custom_call.1} parent=1 // pred_region
      %s96 = ssub.s32 16, 16
      %97 = vsyncadd [#allocation4], %s96
      %s99 = sshll.u32 [#allocation7], 4
      %s100 = int_to_ptr.vmem [resolvable:$true] %s99
      %102 = dma.vmem_to_hbm [thread:$0]  %s100, 16, %s3, [#allocation4]
    $region25: #{tpu_custom_call.1} parent=1 // pred_fallthru
      _
    // Predicated region
    $region26: #{tpu_custom_call.1} parent=1 // pred_check
      _
    $region27: #{tpu_custom_call.1} parent=1 // pred_check_branch
      %104 = sbr.rel (0) target = $region29
    $region28: #{tpu_custom_call.1} parent=1 // pred_region
      %105 = dma.done [#allocation4], 16
    $region29: #{tpu_custom_call.1} parent=1 // pred_fallthru
      _
    %106 = vsyncpa [#allocation3], 1
    %107 = vsyncpa [#allocation6], 1
    %108 = vsyncpa [#allocation4], 1

</llo_original>
